<compile_context>
chip_gen: v5e
topology: v5e:2x2
jax: 0.10.0
libtpu: 0.0.40
codegen_flags: <defaults>
</compile_context>

<pallas_src>
import functools

import jax
import jax.numpy as jnp
from jax.experimental import pallas as pl
from jax.experimental.pallas import tpu as pltpu

LANE = 128
SUBLANE_BF16 = 16
VMEM_BUDGET = 24 * 1024 * 1024   # keep well under the 32 MiB scoped default (v7x-safe)


def _round_up(x, m):
    return ((x + m - 1) // m) * m


def _pick_tm(M, Kp, Np, out_bytes):
    """Largest M tile (<=512, multiple of 16) whose double-buffered footprint fits."""
    def footprint(t):
        a = 2 * t * Kp * 2            # A tile, bf16, double-buffered
        w = 2 * Kp * Np * 2           # resident weight, bf16 (conservative: 2 bufs)
        b = 2 * Np * 4                # bias, f32
        o = 2 * t * Np * out_bytes    # output tile, double-buffered
        return a + w + b + o
    tm = 512
    while tm > SUBLANE_BF16 and footprint(tm) > VMEM_BUDGET:
        tm //= 2
    tm = max(tm, SUBLANE_BF16)
    return min(tm, _round_up(M, SUBLANE_BF16))


# --------------------------------------------------------------------------
# Fused (patches @ W) + bias kernel.  Grid = (M tiles,) only: the whole weight
# and bias are resident in VMEM (constant index_map => one DMA for the whole
# grid), so there is no accumulator scratch and no init/epilogue phases.
# --------------------------------------------------------------------------
def _patch_embed_kernel(a_ref, w_ref, b_ref, o_ref):
    o_ref[...] = (jnp.dot(a_ref[...], w_ref[...],
                          preferred_element_type=jnp.float32)
                  + b_ref[...]).astype(o_ref.dtype)


@functools.lru_cache(maxsize=None)
def _build_patch_matmul(Mp, Kp, Np, tm, out_dtype):
    grid = (Mp // tm,)
    return pl.pallas_call(
        _patch_embed_kernel,
        out_shape=jax.ShapeDtypeStruct((Mp, Np), out_dtype),
        grid_spec=pltpu.PrefetchScalarGridSpec(
            num_scalar_prefetch=0,
            grid=grid,
            in_specs=[
                pl.BlockSpec((tm, Kp), lambda i: (i, 0)),   # patches (bf16), streamed once
                pl.BlockSpec((Kp, Np), lambda i: (0, 0)),   # weight  (bf16), VMEM-resident
                pl.BlockSpec((1, Np), lambda i: (0, 0)),    # bias    (f32),  VMEM-resident
            ],
            out_specs=pl.BlockSpec((tm, Np), lambda i: (i, 0)),
        ),
        compiler_params=pltpu.CompilerParams(
            dimension_semantics=("parallel",),
            vmem_limit_bytes=32 * 1024 * 1024,
        ),
    )


# --------------------------------------------------------------------------
# Parameters: PyTorch-style Conv2d(in_channels, emb_size, P, stride=P) init,
# stored pre-reshaped / pre-padded / pre-cast so the forward pass does no
# weight-side copies.
# --------------------------------------------------------------------------
def make_params(key, in_channels, patch_size, emb_size):
    k_w, k_b = jax.random.split(key)
    K = in_channels * patch_size * patch_size
    bound = 1.0 / (K ** 0.5)   # matches Conv2d's kaiming_uniform_(a=sqrt(5)) bound
    w = jax.random.uniform(k_w, (emb_size, in_channels, patch_size, patch_size),
                           jnp.float32, -bound, bound)
    b = jax.random.uniform(k_b, (emb_size,), jnp.float32, -bound, bound)

    Kp = max(_round_up(K, LANE), LANE)
    Np = max(_round_up(emb_size, LANE), LANE)
    # (emb, C, P, P) -> (C*P*P, emb); row ordering (c, i, j) matches the patch layout.
    w_mat = w.reshape(emb_size, K).T
    w_pad = jnp.zeros((Kp, Np), jnp.bfloat16).at[:K, :emb_size].set(
        w_mat.astype(jnp.bfloat16))
    b_pad = jnp.zeros((1, Np), jnp.float32).at[0, :emb_size].set(b)
    return {
        'patch_size': patch_size,
        'emb_size': emb_size,
        'in_channels': in_channels,
        'w_f32': w_mat,          # kept only for the in-script correctness check
        'b_f32': b,
        'w_pad': w_pad,
        'b_pad': b_pad,
    }


# --------------------------------------------------------------------------
# Forward:  x (B, C, H, W)  ->  (B, (H/P)*(W/P), emb_size)
# NOTE: operands are deliberately bf16 on the MXU (f32 accumulate); pass
# out_dtype=jnp.bfloat16 to also halve the output HBM stream when downstream
# accepts it (biggest win on v6e/v7x where this kernel is memory-bound).
# --------------------------------------------------------------------------
def patch_embedding_forward(params, x, out_dtype=jnp.float32):
    B, C, H, W = x.shape
    P = params['patch_size']
    emb = params['emb_size']
    assert C == params['in_channels'] and H % P == 0 and W % P == 0
    hp, wp = H // P, W // P
    M = B * hp * wp
    K = C * P * P

    # Non-overlapping patch extraction: (B,C,hp,P,wp,P) -> (B,hp,wp,C,P,P) -> (M,K).
    # Cast to bf16 BEFORE the transpose so the layout shuffle moves half the bytes.
    patches = x.astype(jnp.bfloat16).reshape(B, C, hp, P, wp, P)
    patches = jnp.transpose(patches, (0, 2, 4, 1, 3, 5)).reshape(M, K)

    Kp, Np = params['w_pad'].shape
    out_bytes = jnp.dtype(out_dtype).itemsize
    tm = _pick_tm(M, Kp, Np, out_bytes)
    Mp = _round_up(M, tm)

    if (Mp, Kp) != (M, K):
        a = jnp.pad(patches, ((0, Mp - M), (0, Kp - K)))
    else:
        a = patches

    out = _build_patch_matmul(Mp, Kp, Np, tm, out_dtype)(
        a, params['w_pad'], params['b_pad'])
    # When emb is already a multiple of 128 (ViT-B/L) this only trims padded M rows.
    return out[:M, :emb].reshape(B, hp * wp, emb)


# --------------------------------------------------------------------------
if __name__ == "__main__":
    key = jax.random.PRNGKey(0)
    pkey, xkey = jax.random.split(key)

    in_channels, patch_size, emb_size = 4, 4, 32
    B, H, W = 2, 16, 16

    params = make_params(pkey, in_channels, patch_size, emb_size)
    x = jax.random.normal(xkey, (B, in_channels, H, W), jnp.float32)

    out = patch_embedding_forward(params, x)
    out = jax.block_until_ready(out)

    n_patches = (H // patch_size) * (W // patch_size)
    assert out.shape == (B, n_patches, emb_size)
    assert bool(jnp.all(jnp.isfinite(out)))

    # Pure-JAX f32 reference (conv-as-patch-matmul) for a correctness check.
    hp, wp = H // patch_size, W // patch_size
    patches_ref = jnp.transpose(
        x.reshape(B, in_channels, hp, patch_size, wp, patch_size),
        (0, 2, 4, 1, 3, 5)).reshape(B * hp * wp, -1)
    ref = (patches_ref @ params['w_f32'] + params['b_f32']).reshape(
        B, n_patches, emb_size)
    assert bool(jnp.allclose(out, ref, atol=5e-2, rtol=5e-2))  # bf16 operand rounding

    print("KERNEL_OK")
</pallas_src>

<mosaic_0001>
module attributes {stable_mosaic.version = 11 : i64} {
  func.func @_patch_embed_kernel(%arg0: i32, %arg1: memref<32x128xbf16, #tpu.memory_space<vmem>>, %arg2: memref<128x128xbf16, #tpu.memory_space<vmem>>, %arg3: memref<1x128xf32, #tpu.memory_space<vmem>>, %arg4: memref<32x128xf32, #tpu.memory_space<vmem>>) attributes {dimension_semantics = [#tpu.dimension_semantics<parallel>], iteration_bounds = array<i64: 1>, scalar_prefetch = 0 : i64, scratch_operands = 0 : i64, tpu.core_type = #tpu.core_type<tc>, window_params = [{transform_indices = @transform_0, window_bounds = array<i64: 32, 128>}, {pipeline_mode = #tpu.pipeline_mode<synchronous>, transform_indices = @transform_1, window_bounds = array<i64: 128, 128>}, {pipeline_mode = #tpu.pipeline_mode<synchronous>, transform_indices = @transform_2, window_bounds = array<i64: 1, 128>}, {transform_indices = @transform_3, window_bounds = array<i64: 32, 128>}]} {
    %c0 = arith.constant 0 : index
    %c0_0 = arith.constant 0 : index
    %0 = vector.load %arg1[%c0, %c0_0] : memref<32x128xbf16, #tpu.memory_space<vmem>>, vector<32x128xbf16>
    %c0_1 = arith.constant 0 : index
    %c0_2 = arith.constant 0 : index
    %1 = vector.load %arg2[%c0_1, %c0_2] : memref<128x128xbf16, #tpu.memory_space<vmem>>, vector<128x128xbf16>
    %cst = arith.constant dense<0.000000e+00> : vector<32x128xf32>
    %2 = tpu.matmul %0, %1, %cst {dimension_numbers = #tpu.dot_dimension_numbers<[1], [0], [0], [1], [0, 0, 1, 1], [], []>} : vector<32x128xbf16>, vector<128x128xbf16>, vector<32x128xf32> -> vector<32x128xf32>
    %c0_3 = arith.constant 0 : index
    %c0_4 = arith.constant 0 : index
    %3 = vector.load %arg3[%c0_3, %c0_4] : memref<1x128xf32, #tpu.memory_space<vmem>>, vector<1x128xf32>
    %4 = vector.broadcast %3 : vector<1x128xf32> to vector<32x128xf32>
    %5 = arith.addf %2, %4 : vector<32x128xf32>
    %c0_5 = arith.constant 0 : index
    %c0_6 = arith.constant 0 : index
    %6 = vector.load %arg4[%c0_5, %c0_6] : memref<32x128xf32, #tpu.memory_space<vmem>>, vector<32x128xf32>
    tpu.vector_store %arg4[%c0_5, %c0_6], %5 {strides = array<i32>} : memref<32x128xf32, #tpu.memory_space<vmem>>, vector<32x128xf32>,
    return
  }
  func.func @transform_0(%arg0: i32) -> (i32, i32) {
    %c0_i32 = arith.constant 0 : i32
    %c0_i32_0 = arith.constant 0 : i32
    return %arg0, %c0_i32 : i32, i32
  }
  func.func @transform_1(%arg0: i32) -> (i32, i32) {
    %c0_i32 = arith.constant 0 : i32
    %c0_i32_0 = arith.constant 0 : i32
    %c0_i32_1 = arith.constant 0 : i32
    return %c0_i32, %c0_i32_0 : i32, i32
  }
  func.func @transform_2(%arg0: i32) -> (i32, i32) {
    %c0_i32 = arith.constant 0 : i32
    %c0_i32_0 = arith.constant 0 : i32
    %c0_i32_1 = arith.constant 0 : i32
    return %c0_i32, %c0_i32_0 : i32, i32
  }
  func.func @transform_3(%arg0: i32) -> (i32, i32) {
    %c0_i32 = arith.constant 0 : i32
    %c0_i32_0 = arith.constant 0 : i32
    return %arg0, %c0_i32 : i32, i32
  }
}

</mosaic_0001>

<llo_original>
// kernel: tpu_custom_call.1
$region0: #{tpu_custom_call.1}
  #allocation0 [shape = 'u32[]', space=smem, size = 0x4, offset = 0x4, fixed_abs, tag = 'smem constant byte address 0x4 - core index']
  #allocation1 [shape = 'u32[72,128]{1,0:T(1,128)}', space=vmem, size = 0x9000, scoped, tag = 'internal scratch']
  %s0 = inlined_call_operand.hbm [shape: bf16[32,128], index: 0, kind: input, shape index: {}]
  %s1 = inlined_call_operand.hbm [shape: bf16[128,128], index: 1, kind: input, shape index: {}]
  %s2 = inlined_call_operand.vmem [shape: f32[1,128], index: 2, kind: input, shape index: {}]
  %s3 = inlined_call_operand.hbm [shape: f32[32,128], index: 3, kind: output, shape index: {}]
  %s4 = sld [smem:[#allocation0]]
  $region30: #{tpu_custom_call.1} parent=0
    _
  %s6 = ssub.s32 1, %s4
  %s7 = scalar_select 0, %s6, %s4
  $region1: #{tpu_custom_call.1} parent=0
    #allocation2 [shape = 'u8[8192]{0}', space=vmem, size = 0x2000, scoped, tag = 'input window, operand 0, single buffered']
    #allocation3 [shape = 's32[1]{0}', space=sflag, size = 0x4, scoped, tag = 'scoped memory for tpu_custom_call.1']
    #allocation4 [shape = 's32[1]{0}', space=sflag, size = 0x4, scoped, tag = 'scoped memory for tpu_custom_call.1']
    #allocation5 [shape = 'u8[32768]{0}', space=vmem, size = 0x8000, scoped, tag = 'input window, operand 1, single buffered']
    #allocation6 [shape = 's32[1]{0}', space=sflag, size = 0x4, scoped, tag = 'scoped memory for tpu_custom_call.1']
    #allocation7 [shape = 'u8[16384]{0}', space=vmem, size = 0x4000, scoped, tag = 'output window, operand 0, single buffered']
    %8 = vsyncpa [#allocation3], 0
    %9 = vsyncpa [#allocation6], 0
    %10 = vsyncpa [#allocation4], 0
    // Predicated region
    $region2: #{tpu_custom_call.1} parent=1 // pred_check
      _
    $region3: #{tpu_custom_call.1} parent=1 // pred_check_branch
      %12 = sbr.rel (0) target = $region5
    $region4: #{tpu_custom_call.1} parent=1 // pred_region
      %14 = vsyncadd [#allocation3], 0
      %s15 = sshll.u32 %s0, 4
      %s16 = int_to_ptr.hbm [resolvable:$true] %s15
      %s17 = sshll.u32 [#allocation2], 4
      %s18 = int_to_ptr.vmem [resolvable:$true] %s17
      %23 = dma.hbm_to_vmem [thread:$0]  %s16, 256, %s18, [#allocation3], 64, 64, 4
    $region5: #{tpu_custom_call.1} parent=1 // pred_fallthru
      _
    // Predicated region
    $region6: #{tpu_custom_call.1} parent=1 // pred_check
      _
    $region7: #{tpu_custom_call.1} parent=1 // pred_check_branch
      %25 = sbr.rel (0) target = $region9
    $region8: #{tpu_custom_call.1} parent=1 // pred_region
      %27 = vsyncadd [#allocation6], 0
      %s28 = sshll.u32 %s1, 4
      %s29 = int_to_ptr.hbm [resolvable:$true] %s28
      %s30 = sshll.u32 [#allocation5], 4
      %s31 = int_to_ptr.vmem [resolvable:$true] %s30
      %36 = dma.hbm_to_vmem [thread:$0]  %s29, 1024, %s31, [#allocation6], 64, 64, 4
    $region9: #{tpu_custom_call.1} parent=1 // pred_fallthru
      _
    // Predicated region
    $region10: #{tpu_custom_call.1} parent=1 // pred_check
      _
    $region11: #{tpu_custom_call.1} parent=1 // pred_check_branch
      %38 = sbr.rel (0) target = $region13
    $region12: #{tpu_custom_call.1} parent=1 // pred_region
      _
    $region13: #{tpu_custom_call.1} parent=1 // pred_fallthru
      _
    // Predicated region
    $region14: #{tpu_custom_call.1} parent=1 // pred_check
      _
    $region15: #{tpu_custom_call.1} parent=1 // pred_check_branch
      %40 = sbr.rel (0) target = $region17
    $region16: #{tpu_custom_call.1} parent=1 // pred_region
      %42 = dma.done [#allocation3], 256
    $region17: #{tpu_custom_call.1} parent=1 // pred_fallthru
      _
    // Predicated region
    $region18: #{tpu_custom_call.1} parent=1 // pred_check
      _
    $region19: #{tpu_custom_call.1} parent=1 // pred_check_branch
      %44 = sbr.rel (0) target = $region21
    $region20: #{tpu_custom_call.1} parent=1 // pred_region
      %46 = dma.done [#allocation6], 1024
    $region21: #{tpu_custom_call.1} parent=1 // pred_fallthru
      _
    %v47 = vld [vmem:[#allocation2] sm:$0xf]
    %v48 = vld [vmem:[#allocation2 + $0x4] sm:$0xf]
    %v49 = vld [vmem:[#allocation2 + $0x8] sm:$0xf]
    %v50 = vld [vmem:[#allocation2 + $0xc] sm:$0xf]
    %v51 = vld [vmem:[#allocation5] sm:$0xf]
    %v52 = vld [vmem:[#allocation5 + $0x4] sm:$0xf]
    %v53 = vld [vmem:[#allocation5 + $0x8] sm:$0xf]
    %v54 = vld [vmem:[#allocation5 + $0xc] sm:$0xf]
    %v55 = vld [vmem:[#allocation5 + $0x10] sm:$0xf]
    %v56 = vld [vmem:[#allocation5 + $0x14] sm:$0xf]
    %v57 = vld [vmem:[#allocation5 + $0x18] sm:$0xf]
    %v58 = vld [vmem:[#allocation5 + $0x1c] sm:$0xf]
    %v59 = vld [vmem:[#allocation5 + $0x20] sm:$0xf]
    %v60 = vld [vmem:[#allocation5 + $0x24] sm:$0xf]
    %v61 = vld [vmem:[#allocation5 + $0x28] sm:$0xf]
    %v62 = vld [vmem:[#allocation5 + $0x2c] sm:$0xf]
    %v63 = vld [vmem:[#allocation5 + $0x30] sm:$0xf]
    %v64 = vld [vmem:[#allocation5 + $0x34] sm:$0xf]
    %v65 = vld [vmem:[#allocation5 + $0x38] sm:$0xf]
    %v66 = vld [vmem:[#allocation5 + $0x3c] sm:$0xf]
    %v67 = vld [vmem:[%s2] sm:$0x1]
    %v69 = vperm.slane %v67, 0
    %v75 = vunpack.c.l.b16 %v47
    %v76 = vunpack.c.l.b16 %v48
    %v77 = vunpack.c.l.b16 %v49
    %v78 = vunpack.c.l.b16 %v50
    %v79 = vpack.c.b16 %v76, %v75
    %v80 = vpack.c.b16 %v78, %v77
    %v99 = vunpack.c.l.b16 %v51
    %v100 = vunpack.c.l.b16 %v52
    %v101 = vunpack.c.l.b16 %v53
    %v102 = vunpack.c.l.b16 %v54
    %v103 = vunpack.c.l.b16 %v55
    %v104 = vunpack.c.l.b16 %v56
    %v105 = vunpack.c.l.b16 %v57
    %v106 = vunpack.c.l.b16 %v58
    %v107 = vunpack.c.l.b16 %v59
    %v108 = vunpack.c.l.b16 %v60
    %v109 = vunpack.c.l.b16 %v61
    %v110 = vunpack.c.l.b16 %v62
    %v111 = vunpack.c.l.b16 %v63
    %v112 = vunpack.c.l.b16 %v64
    %v113 = vunpack.c.l.b16 %v65
    %v114 = vunpack.c.l.b16 %v66
    %v115 = vpack.c.b16 %v100, %v99
    %v116 = vpack.c.b16 %v102, %v101
    %v117 = vpack.c.b16 %v104, %v103
    %v118 = vpack.c.b16 %v106, %v105
    %v119 = vpack.c.b16 %v108, %v107
    %v120 = vpack.c.b16 %v110, %v109
    %v121 = vpack.c.b16 %v112, %v111
    %v122 = vpack.c.b16 %v114, %v113
    %131 = vmatpush.bf16.msra.mxu0 %v122
    %132 = vmatpush.bf16.msra.mxu0 %v121
    %133 = vmatpush.bf16.msra.mxu0 %v120
    %134 = vmatpush.bf16.msra.mxu0 %v119
    %135 = vmatpush.bf16.msra.mxu0 %v118
    %136 = vmatpush.bf16.msra.mxu0 %v117
    %137 = vmatpush.bf16.msra.mxu0 %v116
    %138 = vmatpush.bf16.msra.mxu0 %v115
    %139 = vmatmul.bf16.gmra.mxu0 %v79
    %v140 = vpop.f32.mrf.mxu0
    %v141 = vadd.f32 %v69, %v140
    %v142 = vpop.f32.mrf.mxu0
    %v143 = vadd.f32 %v69, %v142
    %144 = vmatmul.bf16.gmra.mxu0 %v80
    %v145 = vpop.f32.mrf.mxu0
    %v146 = vadd.f32 %v69, %v145
    %v147 = vpop.f32.mrf.mxu0
    %v148 = vadd.f32 %v69, %v147
    %149 = vdwg.mxu0
    %150 = vst [vmem:[#allocation7] sm:$0xff] %v141
    %151 = vst [vmem:[#allocation7 + $0x8] sm:$0xff] %v143
    %152 = vst [vmem:[#allocation7 + $0x10] sm:$0xff] %v146
    %153 = vst [vmem:[#allocation7 + $0x18] sm:$0xff] %v148
    // Predicated region
    $region22: #{tpu_custom_call.1} parent=1 // pred_check
      _
    $region23: #{tpu_custom_call.1} parent=1 // pred_check_branch
      %155 = sbr.rel (0) target = $region25
    $region24: #{tpu_custom_call.1} parent=1 // pred_region
      %157 = vsyncadd [#allocation4], 0
      %s158 = sshll.u32 [#allocation7], 4
      %s159 = int_to_ptr.vmem [resolvable:$true] %s158
      %s160 = sshll.u32 %s3, 4
      %s161 = int_to_ptr.hbm [resolvable:$true] %s160
      %166 = dma.vmem_to_hbm [thread:$0]  %s159, 512, %s161, [#allocation4], 128, 128, 8
    $region25: #{tpu_custom_call.1} parent=1 // pred_fallthru
      _
    // Predicated region
    $region26: #{tpu_custom_call.1} parent=1 // pred_check
      _
    $region27: #{tpu_custom_call.1} parent=1 // pred_check_branch
      %168 = sbr.rel (0) target = $region29
    $region28: #{tpu_custom_call.1} parent=1 // pred_region
      %170 = dma.done [#allocation4], 512
    $region29: #{tpu_custom_call.1} parent=1 // pred_fallthru
      _
    %171 = vsyncpa [#allocation3], 1
    %172 = vsyncpa [#allocation6], 1
    %173 = vsyncpa [#allocation4], 1

</llo_original>
